<compile_context>
chip_gen: v5e
topology: v5e:2x2
jax: 0.10.0
libtpu: 0.0.40
codegen_flags: <defaults>
</compile_context>

<pallas_src>
import jax
import jax.numpy as jnp
import numpy as np
from jax.experimental import pallas as pl
from jax.experimental.pallas import tpu as pltpu


_LANES = 128
_TARGET_W = 512            # folded output width: 4 vregs, always lane-dense
_MIN_ROWS_PER_STEP = 1024  # only split the grid if each half keeps >=2 MiB/step


def _round_up(x, m):
    return (x + m - 1) // m * m


def _time_encode_kernel(ts_ref, expand_ref, freq_ref, phase_ref, out_ref):
    """Compute one lane-dense (T, W) output tile.

    ts_ref:     (T, F)  folded timestamps (F consecutive logical rows per row)
    expand_ref: (F, W)  one-hot expansion matrix, E[j, j*D + d] = 1
    freq_ref:   (1, W)  basis_freq tiled F times
    phase_ref:  (1, W)  phase tiled F times
    out_ref:    (T, W)  cos(ts * freq + phase), lane-dense
    """
    # Exact lane expansion: ts_wide[t, k] = ts[t, k // D].  A 0/1 matrix at
    # HIGHEST precision (multi-pass f32 on the MXU) is exact; do NOT relax to
    # DEFAULT precision -- single-pass bf16 would silently truncate ts.
    ts_wide = jax.lax.dot_general(
        ts_ref[...], expand_ref[...],
        dimension_numbers=(((1,), (0,)), ((), ())),
        precision=jax.lax.Precision.HIGHEST,
        preferred_element_type=jnp.float32,
    )
    out_ref[...] = jnp.cos(
        ts_wide * freq_ref[...] + phase_ref[...]
    ).astype(out_ref.dtype)


def _choose_fold(d):
    """Largest fold so W = fold*D is lane-dense (multiple of 128), up to 512."""
    if d <= _TARGET_W and _TARGET_W % d == 0:
        return _TARGET_W // d
    if d <= _LANES and _LANES % d == 0:
        return _LANES // d
    return 1


def _choose_tile_rows(nr, tile_rows):
    """Balanced tile size: even number of >=8-row steps, no tiny ragged tail."""
    if nr <= tile_rows:
        # Split into two balanced halves when large enough so both v7x
        # TensorCores get work; otherwise a single full-array block.
        if nr >= 2 * _MIN_ROWS_PER_STEP:
            return _round_up(pl.cdiv(nr, 2), 8)
        return nr
    n_steps = pl.cdiv(nr, tile_rows)
    if n_steps % 2:
        n_steps += 1          # even step count -> balanced two-core split
    return _round_up(pl.cdiv(nr, n_steps), 8)


def time_encode(ts, basis_freq, phase, *, tile_rows=2048, out_dtype=jnp.float32):
    """ts: (B, L) float32 -> (B, L, D)  (TGAT TimeEncode.forward)."""
    B, L = ts.shape
    D = int(basis_freq.shape[0])
    N = B * L

    fold = _choose_fold(D)
    W = fold * D

    # Pad logical rows to a multiple of fold*8 so the folded row count nr is a
    # multiple of 8 (sublane-aligned blocks, no degenerate tiny tiles).
    ts_flat = ts.reshape(N).astype(jnp.float32)
    n_pad = _round_up(N, fold * 8)
    if n_pad != N:
        ts_flat = jnp.pad(ts_flat, (0, n_pad - N))
    nr = n_pad // fold                      # folded row count (multiple of 8)
    ts_rows = ts_flat.reshape(nr, fold)

    freq_w = jnp.tile(basis_freq.astype(jnp.float32), fold).reshape(1, W)
    phase_w = jnp.tile(phase.astype(jnp.float32), fold).reshape(1, W)
    # One-hot expansion matrix: expand[j, j*D + d] = 1.0 (static constant).
    expand = jnp.asarray(np.repeat(np.eye(fold, dtype=np.float32), D, axis=1))

    tr = _choose_tile_rows(nr, tile_rows)
    grid = (pl.cdiv(nr, tr),)

    out_bytes = jnp.dtype(out_dtype).itemsize
    # Explicit scoped-VMEM sizing: double-buffered output block + double-
    # buffered ts block (NOTE: (tr, fold) lane-pads to 128 lanes in VMEM) +
    # double-buffered resident constants, plus margin.
    vmem_need = (
        2 * tr * W * out_bytes
        + 2 * tr * _round_up(fold, _LANES) * 4
        + 2 * (_round_up(fold, 8) * W * 4 + 2 * 8 * W * 4)
    )
    vmem_limit = min(max(int(vmem_need * 1.25) + (1 << 20), 16 << 20), 48 << 20)

    # Honest cost estimate: one-hot expansion matmul (~3 passes under
    # Precision.HIGHEST) + elementwise mul/add; cos counted as transcendentals.
    flops = 3 * 2 * nr * fold * W + 2 * n_pad * D

    out_folded = pl.pallas_call(
        _time_encode_kernel,
        out_shape=jax.ShapeDtypeStruct((nr, W), out_dtype),
        grid=grid,
        in_specs=[
            pl.BlockSpec((tr, fold), lambda i: (i, 0)),   # streamed ts tiles
            pl.BlockSpec((fold, W), lambda i: (0, 0)),    # resident constants
            pl.BlockSpec((1, W), lambda i: (0, 0)),
            pl.BlockSpec((1, W), lambda i: (0, 0)),
        ],
        out_specs=pl.BlockSpec((tr, W), lambda i: (i, 0)),
        compiler_params=pltpu.CompilerParams(
            dimension_semantics=("parallel",),
            vmem_limit_bytes=vmem_limit,
        ),
        cost_estimate=pl.CostEstimate(
            flops=flops,
            transcendentals=n_pad * D,
            bytes_accessed=4 * n_pad + out_bytes * n_pad * D
                           + 4 * (fold * W + 2 * W),
        ),
    )(ts_rows, expand, freq_w, phase_w)

    # (nr, fold*D) row-major == (n_pad, D) row-major: free unfold.
    out_flat = out_folded.reshape(n_pad, D)
    if n_pad != N:
        out_flat = out_flat[:N]
    return out_flat.reshape(B, L, D)


if __name__ == "__main__":
    # Deterministic parameter init matching TimeEncode.__init__ (expand_dim=32).
    expand_dim = 32
    basis_freq = jnp.asarray(1.0 / 10 ** np.linspace(0, 9, expand_dim),
                             dtype=jnp.float32)
    phase = jnp.zeros((expand_dim,), dtype=jnp.float32)

    # Small deterministic input: batch=2, seq_len=8.
    key = jax.random.PRNGKey(0)
    ts = jax.random.uniform(key, (2, 8), dtype=jnp.float32) * 100.0

    out = time_encode(ts, basis_freq, phase)
    jax.block_until_ready(out)

    # Sanity check against pure-JAX reference.
    ref = jnp.cos(ts[:, :, None] * basis_freq[None, None, :]
                  + phase[None, None, :])
    assert out.shape == (2, 8, expand_dim)
    assert jnp.allclose(out, ref, atol=1e-5), "mismatch vs reference"

    print("KERNEL_OK")
</pallas_src>

<mosaic_0001>
module attributes {stable_mosaic.version = 11 : i64} {
  func.func @_time_encode_kernel(%arg0: i32, %arg1: memref<8x16xf32, #tpu.memory_space<vmem>>, %arg2: memref<16x512xf32, #tpu.memory_space<vmem>>, %arg3: memref<1x512xf32, #tpu.memory_space<vmem>>, %arg4: memref<1x512xf32, #tpu.memory_space<vmem>>, %arg5: memref<8x512xf32, #tpu.memory_space<vmem>>) attributes {dimension_semantics = [#tpu.dimension_semantics<parallel>], iteration_bounds = array<i64: 1>, scalar_prefetch = 0 : i64, scratch_operands = 0 : i64, tpu.core_type = #tpu.core_type<tc>, window_params = [{transform_indices = @transform_0, window_bounds = array<i64: 8, 16>}, {pipeline_mode = #tpu.pipeline_mode<synchronous>, transform_indices = @transform_1, window_bounds = array<i64: 16, 512>}, {pipeline_mode = #tpu.pipeline_mode<synchronous>, transform_indices = @transform_2, window_bounds = array<i64: 1, 512>}, {pipeline_mode = #tpu.pipeline_mode<synchronous>, transform_indices = @transform_3, window_bounds = array<i64: 1, 512>}, {transform_indices = @transform_4, window_bounds = array<i64: 8, 512>}]} {
    %c0 = arith.constant 0 : index
    %c0_0 = arith.constant 0 : index
    %0 = vector.load %arg1[%c0, %c0_0] : memref<8x16xf32, #tpu.memory_space<vmem>>, vector<8x16xf32>
    %c0_1 = arith.constant 0 : index
    %c0_2 = arith.constant 0 : index
    %1 = vector.load %arg2[%c0_1, %c0_2] : memref<16x512xf32, #tpu.memory_space<vmem>>, vector<16x512xf32>
    %cst = arith.constant dense<0.000000e+00> : vector<8x512xf32>
    %2 = tpu.matmul %0, %1, %cst {dimension_numbers = #tpu.dot_dimension_numbers<[1], [0], [0], [1], [0, 0, 1, 1], [], []>, precision = #tpu.contract_precision<fp32>} : vector<8x16xf32>, vector<16x512xf32>, vector<8x512xf32> -> vector<8x512xf32>
    %c0_3 = arith.constant 0 : index
    %c0_4 = arith.constant 0 : index
    %3 = vector.load %arg3[%c0_3, %c0_4] : memref<1x512xf32, #tpu.memory_space<vmem>>, vector<1x512xf32>
    %4 = vector.broadcast %3 : vector<1x512xf32> to vector<8x512xf32>
    %5 = arith.mulf %2, %4 : vector<8x512xf32>
    %c0_5 = arith.constant 0 : index
    %c0_6 = arith.constant 0 : index
    %6 = vector.load %arg4[%c0_5, %c0_6] : memref<1x512xf32, #tpu.memory_space<vmem>>, vector<1x512xf32>
    %7 = vector.broadcast %6 : vector<1x512xf32> to vector<8x512xf32>
    %8 = arith.addf %5, %7 : vector<8x512xf32>
    %9 = math.cos %8 : vector<8x512xf32>
    %c0_7 = arith.constant 0 : index
    %c0_8 = arith.constant 0 : index
    %10 = vector.load %arg5[%c0_7, %c0_8] : memref<8x512xf32, #tpu.memory_space<vmem>>, vector<8x512xf32>
    tpu.vector_store %arg5[%c0_7, %c0_8], %9 {strides = array<i32>} : memref<8x512xf32, #tpu.memory_space<vmem>>, vector<8x512xf32>,
    return
  }
  func.func @transform_0(%arg0: i32) -> (i32, i32) {
    %c0_i32 = arith.constant 0 : i32
    %c0_i32_0 = arith.constant 0 : i32
    return %arg0, %c0_i32 : i32, i32
  }
  func.func @transform_1(%arg0: i32) -> (i32, i32) {
    %c0_i32 = arith.constant 0 : i32
    %c0_i32_0 = arith.constant 0 : i32
    %c0_i32_1 = arith.constant 0 : i32
    return %c0_i32, %c0_i32_0 : i32, i32
  }
  func.func @transform_2(%arg0: i32) -> (i32, i32) {
    %c0_i32 = arith.constant 0 : i32
    %c0_i32_0 = arith.constant 0 : i32
    %c0_i32_1 = arith.constant 0 : i32
    return %c0_i32, %c0_i32_0 : i32, i32
  }
  func.func @transform_3(%arg0: i32) -> (i32, i32) {
    %c0_i32 = arith.constant 0 : i32
    %c0_i32_0 = arith.constant 0 : i32
    %c0_i32_1 = arith.constant 0 : i32
    return %c0_i32, %c0_i32_0 : i32, i32
  }
  func.func @transform_4(%arg0: i32) -> (i32, i32) {
    %c0_i32 = arith.constant 0 : i32
    %c0_i32_0 = arith.constant 0 : i32
    return %arg0, %c0_i32 : i32, i32
  }
}

</mosaic_0001>

<llo_original>
// kernel: tpu_custom_call.1
$region0: #{tpu_custom_call.1}
  #allocation0 [shape = 'u32[]', space=smem, size = 0x4, offset = 0x4, fixed_abs, tag = 'smem constant byte address 0x4 - core index']
  #allocation1 [shape = 'u32[72,128]{1,0:T(1,128)}', space=vmem, size = 0x9000, scoped, tag = 'internal scratch']
  %s0 = inlined_call_operand.hbm [shape: f32[8,16], index: 0, kind: input, shape index: {}]
  %s1 = inlined_call_operand.hbm [shape: f32[16,512], index: 1, kind: input, shape index: {}]
  %s2 = inlined_call_operand.hbm [shape: f32[1,512], index: 2, kind: input, shape index: {}]
  %s3 = inlined_call_operand.hbm [shape: f32[1,512], index: 3, kind: input, shape index: {}]
  %s4 = inlined_call_operand.hbm [shape: f32[8,512], index: 4, kind: output, shape index: {}]
  %s5 = sld [smem:[#allocation0]]
  $region42: #{tpu_custom_call.1} parent=0
    _
  %s7 = ssub.s32 1, %s5
  %s8 = scalar_select 0, %s7, %s5
  $region1: #{tpu_custom_call.1} parent=0
    #allocation2 [shape = 'u8[4096]{0}', space=vmem, size = 0x1000, scoped, tag = 'input window, operand 0, single buffered']
    #allocation3 [shape = 's32[1]{0}', space=sflag, size = 0x4, scoped, tag = 'scoped memory for tpu_custom_call.1']
    #allocation4 [shape = 's32[1]{0}', space=sflag, size = 0x4, scoped, tag = 'scoped memory for tpu_custom_call.1']
    #allocation5 [shape = 'u8[32768]{0}', space=vmem, size = 0x8000, scoped, tag = 'input window, operand 1, single buffered']
    #allocation6 [shape = 's32[1]{0}', space=sflag, size = 0x4, scoped, tag = 'scoped memory for tpu_custom_call.1']
    #allocation7 [shape = 'u8[2048]{0}', space=vmem, size = 0x800, scoped, tag = 'input window, operand 2, single buffered']
    #allocation8 [shape = 'u8[2048]{0}', space=vmem, size = 0x800, scoped, tag = 'input window, operand 3, single buffered']
    #allocation9 [shape = 's32[1]{0}', space=sflag, size = 0x4, scoped, tag = 'scoped memory for tpu_custom_call.1']
    #allocation10 [shape = 'u8[16384]{0}', space=vmem, size = 0x4000, scoped, tag = 'output window, operand 0, single buffered']
    %9 = vsyncpa [#allocation3], 0
    %10 = vsyncpa [#allocation6], 0
    %11 = vsyncpa [#allocation9], 0
    %12 = vsyncpa [#allocation4], 0
    // Predicated region
    $region2: #{tpu_custom_call.1} parent=1 // pred_check
      _
    $region3: #{tpu_custom_call.1} parent=1 // pred_check_branch
      %14 = sbr.rel (0) target = $region5
    $region4: #{tpu_custom_call.1} parent=1 // pred_region
      %16 = vsyncadd [#allocation3], 0
      %s18 = sshll.u32 %s0, 4
      %s19 = int_to_ptr.hbm [resolvable:$true] %s18
      %s20 = sshll.u32 [#allocation2], 4
      %s21 = int_to_ptr.vmem [resolvable:$true] %s20
      %23 = dma.hbm_to_vmem [thread:$0]  %s19, 128, %s21, [#allocation3]
    $region5: #{tpu_custom_call.1} parent=1 // pred_fallthru
      _
    // Predicated region
    $region6: #{tpu_custom_call.1} parent=1 // pred_check
      _
    $region7: #{tpu_custom_call.1} parent=1 // pred_check_branch
      %25 = sbr.rel (0) target = $region9
    $region8: #{tpu_custom_call.1} parent=1 // pred_region
      %27 = vsyncadd [#allocation6], 0
      %s28 = sshll.u32 %s1, 4
      %s29 = int_to_ptr.hbm [resolvable:$true] %s28
      %s30 = sshll.u32 [#allocation5], 4
      %s31 = int_to_ptr.vmem [resolvable:$true] %s30
      %36 = dma.hbm_to_vmem [thread:$0]  %s29, 1024, %s31, [#allocation6], 512, 512, 32
    $region9: #{tpu_custom_call.1} parent=1 // pred_fallthru
      _
    // Predicated region
    $region10: #{tpu_custom_call.1} parent=1 // pred_check
      _
    $region11: #{tpu_custom_call.1} parent=1 // pred_check_branch
      %38 = sbr.rel (0) target = $region13
    $region12: #{tpu_custom_call.1} parent=1 // pred_region
      %40 = vsyncadd [#allocation6], 0
      %s42 = sshll.u32 %s2, 4
      %s43 = int_to_ptr.hbm [resolvable:$true] %s42
      %s44 = sshll.u32 [#allocation7], 4
      %s45 = int_to_ptr.vmem [resolvable:$true] %s44
      %47 = dma.hbm_to_vmem [thread:$0]  %s43, 64, %s45, [#allocation6]
    $region13: #{tpu_custom_call.1} parent=1 // pred_fallthru
      _
    // Predicated region
    $region14: #{tpu_custom_call.1} parent=1 // pred_check
      _
    $region15: #{tpu_custom_call.1} parent=1 // pred_check_branch
      %49 = sbr.rel (0) target = $region17
    $region16: #{tpu_custom_call.1} parent=1 // pred_region
      %51 = vsyncadd [#allocation9], 0
      %s53 = sshll.u32 %s3, 4
      %s54 = int_to_ptr.hbm [resolvable:$true] %s53
      %s55 = sshll.u32 [#allocation8], 4
      %s56 = int_to_ptr.vmem [resolvable:$true] %s55
      %58 = dma.hbm_to_vmem [thread:$0]  %s54, 64, %s56, [#allocation9]
    $region17: #{tpu_custom_call.1} parent=1 // pred_fallthru
      _
    // Predicated region
    $region18: #{tpu_custom_call.1} parent=1 // pred_check
      _
    $region19: #{tpu_custom_call.1} parent=1 // pred_check_branch
      %60 = sbr.rel (0) target = $region21
    $region20: #{tpu_custom_call.1} parent=1 // pred_region
      %62 = dma.done [#allocation3], 128
    $region21: #{tpu_custom_call.1} parent=1 // pred_fallthru
      _
    // Predicated region
    $region22: #{tpu_custom_call.1} parent=1 // pred_check
      _
    $region23: #{tpu_custom_call.1} parent=1 // pred_check_branch
      %64 = sbr.rel (0) target = $region25
    $region24: #{tpu_custom_call.1} parent=1 // pred_region
      %66 = dma.done [#allocation6], 1024
    $region25: #{tpu_custom_call.1} parent=1 // pred_fallthru
      _
    // Predicated region
    $region26: #{tpu_custom_call.1} parent=1 // pred_check
      _
    $region27: #{tpu_custom_call.1} parent=1 // pred_check_branch
      %68 = sbr.rel (0) target = $region29
    $region28: #{tpu_custom_call.1} parent=1 // pred_region
      %70 = dma.done [#allocation6], 64
    $region29: #{tpu_custom_call.1} parent=1 // pred_fallthru
      _
    // Predicated region
    $region30: #{tpu_custom_call.1} parent=1 // pred_check
      _
    $region31: #{tpu_custom_call.1} parent=1 // pred_check_branch
      %72 = sbr.rel (0) target = $region33
    $region32: #{tpu_custom_call.1} parent=1 // pred_region
      %74 = dma.done [#allocation9], 64
    $region33: #{tpu_custom_call.1} parent=1 // pred_fallthru
      _
    %v75 = vld [vmem:[#allocation2] sm:$0xff]
    %v76 = vld [vmem:[#allocation5] sm:$0xff]
    %v77 = vld [vmem:[#allocation5 + $0x8] sm:$0xff]
    %v78 = vld [vmem:[#allocation5 + $0x10] sm:$0xff]
    %v79 = vld [vmem:[#allocation5 + $0x18] sm:$0xff]
    %v80 = vld [vmem:[#allocation5 + $0x20] sm:$0xff]
    %v81 = vld [vmem:[#allocation5 + $0x28] sm:$0xff]
    %v82 = vld [vmem:[#allocation5 + $0x30] sm:$0xff]
    %v83 = vld [vmem:[#allocation5 + $0x38] sm:$0xff]
    %vm84 = vcmask 130048
    %v86 = vsel %vm84, %v75, 0
    %88 = vmatpush.msra.mxu0 0.0
    %89 = vmatpush.msra.mxu0 0.0
    %90 = vmatpush.msra.mxu0 0.0
    %91 = vmatpush.msra.mxu0 0.0
    %92 = vmatpush.msra.mxu0 0.0
    %93 = vmatpush.msra.mxu0 0.0
    %94 = vmatpush.msra.mxu0 0.0
    %95 = vmatpush.msra.mxu0 0.0
    %96 = vmatpush.msra.mxu0 0.0
    %97 = vmatpush.msra.mxu0 0.0
    %98 = vmatpush.msra.mxu0 0.0
    %99 = vmatpush.msra.mxu0 0.0
    %100 = vmatpush.msra.mxu0 0.0
    %101 = vmatpush.msra.mxu0 0.0
    %v102 = vand.u32 %v80, 4294901760
    %103 = vmatpush.msra.mxu0 %v102
    %v104 = vand.u32 %v76, 4294901760
    %105 = vmatpush.msra.mxu0 %v104
    %v106 = vand.u32 %v86, 4294901760
    %v107 = vsub.f32 %v86, %v106
    %v108 = vand.u32 %v107, 4294901760
    %v109 = vsub.f32 %v107, %v108
    %v110 = vand.u32 %v109, 4294901760
    %111 = vmatmul.f32.gmra.mxu0 %v110
    %v112 = vpop.f32.mrf.mxu0
    %v113 = vadd.f32 0.0, %v112
    %114 = vdwg.mxu0
    %115 = vmatpush.msra.mxu0 0.0
    %116 = vmatpush.msra.mxu0 0.0
    %117 = vmatpush.msra.mxu0 0.0
    %118 = vmatpush.msra.mxu0 0.0
    %119 = vmatpush.msra.mxu0 0.0
    %120 = vmatpush.msra.mxu0 0.0
    %121 = vmatpush.msra.mxu0 0.0
    %122 = vmatpush.msra.mxu0 0.0
    %123 = vmatpush.msra.mxu0 0.0
    %124 = vmatpush.msra.mxu0 0.0
    %125 = vmatpush.msra.mxu0 0.0
    %126 = vmatpush.msra.mxu0 0.0
    %127 = vmatpush.msra.mxu0 0.0
    %128 = vmatpush.msra.mxu0 0.0
    %v129 = vand.u32 %v80, 4294901760
    %v130 = vsub.f32 %v80, %v129
    %v131 = vand.u32 %v130, 4294901760
    %v132 = vsub.f32 %v130, %v131
    %v133 = vand.u32 %v132, 4294901760
    %134 = vmatpush.msra.mxu0 %v133
    %v135 = vand.u32 %v76, 4294901760
    %v136 = vsub.f32 %v76, %v135
    %v137 = vand.u32 %v136, 4294901760
    %v138 = vsub.f32 %v136, %v137
    %v139 = vand.u32 %v138, 4294901760
    %140 = vmatpush.msra.mxu0 %v139
    %v141 = vand.u32 %v86, 4294901760
    %142 = vmatmul.f32.gmra.mxu0 %v141
    %v143 = vpop.f32.mrf.mxu0
    %v144 = vadd.f32 %v113, %v143
    %145 = vdwg.mxu0
    %146 = vmatpush.msra.mxu0 0.0
    %147 = vmatpush.msra.mxu0 0.0
    %148 = vmatpush.msra.mxu0 0.0
    %149 = vmatpush.msra.mxu0 0.0
    %150 = vmatpush.msra.mxu0 0.0
    %151 = vmatpush.msra.mxu0 0.0
    %152 = vmatpush.msra.mxu0 0.0
    %153 = vmatpush.msra.mxu0 0.0
    %154 = vmatpush.msra.mxu0 0.0
    %155 = vmatpush.msra.mxu0 0.0
    %156 = vmatpush.msra.mxu0 0.0
    %157 = vmatpush.msra.mxu0 0.0
    %158 = vmatpush.msra.mxu0 0.0
    %159 = vmatpush.msra.mxu0 0.0
    %v160 = vand.u32 %v80, 4294901760
    %v161 = vsub.f32 %v80, %v160
    %162 = vmatpush.msra.mxu0 %v161
    %v163 = vand.u32 %v76, 4294901760
    %v164 = vsub.f32 %v76, %v163
    %165 = vmatpush.msra.mxu0 %v164
    %v166 = vand.u32 %v86, 4294901760
    %v167 = vsub.f32 %v86, %v166
    %168 = vmatmul.f32.gmra.mxu0 %v167
    %v169 = vpop.f32.mrf.mxu0
    %v170 = vadd.f32 %v144, %v169
    %171 = vdwg.mxu0
    %172 = vmatpush.msra.mxu0 0.0
    %173 = vmatpush.msra.mxu0 0.0
    %174 = vmatpush.msra.mxu0 0.0
    %175 = vmatpush.msra.mxu0 0.0
    %176 = vmatpush.msra.mxu0 0.0
    %177 = vmatpush.msra.mxu0 0.0
    %178 = vmatpush.msra.mxu0 0.0
    %179 = vmatpush.msra.mxu0 0.0
    %180 = vmatpush.msra.mxu0 0.0
    %181 = vmatpush.msra.mxu0 0.0
    %182 = vmatpush.msra.mxu0 0.0
    %183 = vmatpush.msra.mxu0 0.0
    %184 = vmatpush.msra.mxu0 0.0
    %185 = vmatpush.msra.mxu0 0.0
    %v186 = vand.u32 %v80, 4294901760
    %187 = vmatpush.msra.mxu0 %v186
    %v188 = vand.u32 %v76, 4294901760
    %189 = vmatpush.msra.mxu0 %v188
    %v190 = vand.u32 %v86, 4294901760
    %v191 = vsub.f32 %v86, %v190
    %v192 = vand.u32 %v191, 4294901760
    %193 = vmatmul.f32.gmra.mxu0 %v192
    %v194 = vpop.f32.mrf.mxu0
    %v195 = vadd.f32 %v170, %v194
    %196 = vdwg.mxu0
    %197 = vmatpush.msra.mxu0 0.0
    %198 = vmatpush.msra.mxu0 0.0
    %199 = vmatpush.msra.mxu0 0.0
    %200 = vmatpush.msra.mxu0 0.0
    %201 = vmatpush.msra.mxu0 0.0
    %202 = vmatpush.msra.mxu0 0.0
    %203 = vmatpush.msra.mxu0 0.0
    %204 = vmatpush.msra.mxu0 0.0
    %205 = vmatpush.msra.mxu0 0.0
    %206 = vmatpush.msra.mxu0 0.0
    %207 = vmatpush.msra.mxu0 0.0
    %208 = vmatpush.msra.mxu0 0.0
    %209 = vmatpush.msra.mxu0 0.0
    %210 = vmatpush.msra.mxu0 0.0
    %v211 = vand.u32 %v80, 4294901760
    %v212 = vsub.f32 %v80, %v211
    %v213 = vand.u32 %v212, 4294901760
    %214 = vmatpush.msra.mxu0 %v213
    %v215 = vand.u32 %v76, 4294901760
    %v216 = vsub.f32 %v76, %v215
    %v217 = vand.u32 %v216, 4294901760
    %218 = vmatpush.msra.mxu0 %v217
    %v219 = vand.u32 %v86, 4294901760
    %220 = vmatmul.f32.gmra.mxu0 %v219
    %v221 = vpop.f32.mrf.mxu0
    %v222 = vadd.f32 %v195, %v221
    %223 = vdwg.mxu0
    %224 = vmatpush.msra.mxu0 0.0
    %225 = vmatpush.msra.mxu0 0.0
    %226 = vmatpush.msra.mxu0 0.0
    %227 = vmatpush.msra.mxu0 0.0
    %228 = vmatpush.msra.mxu0 0.0
    %229 = vmatpush.msra.mxu0 0.0
    %230 = vmatpush.msra.mxu0 0.0
    %231 = vmatpush.msra.mxu0 0.0
    %232 = vmatpush.msra.mxu0 0.0
    %233 = vmatpush.msra.mxu0 0.0
    %234 = vmatpush.msra.mxu0 0.0
    %235 = vmatpush.msra.mxu0 0.0
    %236 = vmatpush.msra.mxu0 0.0
    %237 = vmatpush.msra.mxu0 0.0
    %v238 = vand.u32 %v80, 4294901760
    %239 = vmatpush.msra.mxu0 %v238
    %v240 = vand.u32 %v76, 4294901760
    %241 = vmatpush.msra.mxu0 %v240
    %v242 = vand.u32 %v86, 4294901760
    %243 = vmatmul.f32.gmra.mxu0 %v242
    %v244 = vpop.f32.mrf.mxu0
    %v245 = vadd.f32 %v222, %v244
    %246 = vdwg.mxu0
    %247 = vmatpush.msra.mxu0 0.0
    %248 = vmatpush.msra.mxu0 0.0
    %249 = vmatpush.msra.mxu0 0.0
    %250 = vmatpush.msra.mxu0 0.0
    %251 = vmatpush.msra.mxu0 0.0
    %252 = vmatpush.msra.mxu0 0.0
    %253 = vmatpush.msra.mxu0 0.0
    %254 = vmatpush.msra.mxu0 0.0
    %255 = vmatpush.msra.mxu0 0.0
    %256 = vmatpush.msra.mxu0 0.0
    %257 = vmatpush.msra.mxu0 0.0
    %258 = vmatpush.msra.mxu0 0.0
    %259 = vmatpush.msra.mxu0 0.0
    %260 = vmatpush.msra.mxu0 0.0
    %v261 = vand.u32 %v81, 4294901760
    %262 = vmatpush.msra.mxu0 %v261
    %v263 = vand.u32 %v77, 4294901760
    %264 = vmatpush.msra.mxu0 %v263
    %v265 = vand.u32 %v86, 4294901760
    %v266 = vsub.f32 %v86, %v265
    %v267 = vand.u32 %v266, 4294901760
    %v268 = vsub.f32 %v266, %v267
    %v269 = vand.u32 %v268, 4294901760
    %270 = vmatmul.f32.gmra.mxu0 %v269
    %v271 = vpop.f32.mrf.mxu0
    %v272 = vadd.f32 0.0, %v271
    %273 = vdwg.mxu0
    %274 = vmatpush.msra.mxu0 0.0
    %275 = vmatpush.msra.mxu0 0.0
    %276 = vmatpush.msra.mxu0 0.0
    %277 = vmatpush.msra.mxu0 0.0
    %278 = vmatpush.msra.mxu0 0.0
    %279 = vmatpush.msra.mxu0 0.0
    %280 = vmatpush.msra.mxu0 0.0
    %281 = vmatpush.msra.mxu0 0.0
    %282 = vmatpush.msra.mxu0 0.0
    %283 = vmatpush.msra.mxu0 0.0
    %284 = vmatpush.msra.mxu0 0.0
    %285 = vmatpush.msra.mxu0 0.0
    %286 = vmatpush.msra.mxu0 0.0
    %287 = vmatpush.msra.mxu0 0.0
    %v288 = vand.u32 %v81, 4294901760
    %v289 = vsub.f32 %v81, %v288
    %v290 = vand.u32 %v289, 4294901760
    %v291 = vsub.f32 %v289, %v290
    %v292 = vand.u32 %v291, 4294901760
    %293 = vmatpush.msra.mxu0 %v292
    %v294 = vand.u32 %v77, 4294901760
    %v295 = vsub.f32 %v77, %v294
    %v296 = vand.u32 %v295, 4294901760
    %v297 = vsub.f32 %v295, %v296
    %v298 = vand.u32 %v297, 4294901760
    %299 = vmatpush.msra.mxu0 %v298
    %v300 = vand.u32 %v86, 4294901760
    %301 = vmatmul.f32.gmra.mxu0 %v300
    %v302 = vpop.f32.mrf.mxu0
    %v303 = vadd.f32 %v272, %v302
    %304 = vdwg.mxu0
    %305 = vmatpush.msra.mxu0 0.0
    %306 = vmatpush.msra.mxu0 0.0
    %307 = vmatpush.msra.mxu0 0.0
    %308 = vmatpush.msra.mxu0 0.0
    %309 = vmatpush.msra.mxu0 0.0
    %310 = vmatpush.msra.mxu0 0.0
    %311 = vmatpush.msra.mxu0 0.0
    %312 = vmatpush.msra.mxu0 0.0
    %313 = vmatpush.msra.mxu0 0.0
    %314 = vmatpush.msra.mxu0 0.0
    %315 = vmatpush.msra.mxu0 0.0
    %316 = vmatpush.msra.mxu0 0.0
    %317 = vmatpush.msra.mxu0 0.0
    %318 = vmatpush.msra.mxu0 0.0
    %v319 = vand.u32 %v81, 4294901760
    %v320 = vsub.f32 %v81, %v319
    %321 = vmatpush.msra.mxu0 %v320
    %v322 = vand.u32 %v77, 4294901760
    %v323 = vsub.f32 %v77, %v322
    %324 = vmatpush.msra.mxu0 %v323
    %v325 = vand.u32 %v86, 4294901760
    %v326 = vsub.f32 %v86, %v325
    %327 = vmatmul.f32.gmra.mxu0 %v326
    %v328 = vpop.f32.mrf.mxu0
    %v329 = vadd.f32 %v303, %v328
    %330 = vdwg.mxu0
    %331 = vmatpush.msra.mxu0 0.0
    %332 = vmatpush.msra.mxu0 0.0
    %333 = vmatpush.msra.mxu0 0.0
    %334 = vmatpush.msra.mxu0 0.0
    %335 = vmatpush.msra.mxu0 0.0
    %336 = vmatpush.msra.mxu0 0.0
    %337 = vmatpush.msra.mxu0 0.0
    %338 = vmatpush.msra.mxu0 0.0
    %339 = vmatpush.msra.mxu0 0.0
    %340 = vmatpush.msra.mxu0 0.0
    %341 = vmatpush.msra.mxu0 0.0
    %342 = vmatpush.msra.mxu0 0.0
    %343 = vmatpush.msra.mxu0 0.0
    %344 = vmatpush.msra.mxu0 0.0
    %v345 = vand.u32 %v81, 4294901760
    %346 = vmatpush.msra.mxu0 %v345
    %v347 = vand.u32 %v77, 4294901760
    %348 = vmatpush.msra.mxu0 %v347
    %v349 = vand.u32 %v86, 4294901760
    %v350 = vsub.f32 %v86, %v349
    %v351 = vand.u32 %v350, 4294901760
    %352 = vmatmul.f32.gmra.mxu0 %v351
    %v353 = vpop.f32.mrf.mxu0
    %v354 = vadd.f32 %v329, %v353
    %355 = vdwg.mxu0
    %356 = vmatpush.msra.mxu0 0.0
    %357 = vmatpush.msra.mxu0 0.0
    %358 = vmatpush.msra.mxu0 0.0
    %359 = vmatpush.msra.mxu0 0.0
    %360 = vmatpush.msra.mxu0 0.0
    %361 = vmatpush.msra.mxu0 0.0
    %362 = vmatpush.msra.mxu0 0.0
    %363 = vmatpush.msra.mxu0 0.0
    %364 = vmatpush.msra.mxu0 0.0
    %365 = vmatpush.msra.mxu0 0.0
    %366 = vmatpush.msra.mxu0 0.0
    %367 = vmatpush.msra.mxu0 0.0
    %368 = vmatpush.msra.mxu0 0.0
    %369 = vmatpush.msra.mxu0 0.0
    %v370 = vand.u32 %v81, 4294901760
    %v371 = vsub.f32 %v81, %v370
    %v372 = vand.u32 %v371, 4294901760
    %373 = vmatpush.msra.mxu0 %v372
    %v374 = vand.u32 %v77, 4294901760
    %v375 = vsub.f32 %v77, %v374
    %v376 = vand.u32 %v375, 4294901760
    %377 = vmatpush.msra.mxu0 %v376
    %v378 = vand.u32 %v86, 4294901760
    %379 = vmatmul.f32.gmra.mxu0 %v378
    %v380 = vpop.f32.mrf.mxu0
    %v381 = vadd.f32 %v354, %v380
    %382 = vdwg.mxu0
    %383 = vmatpush.msra.mxu0 0.0
    %384 = vmatpush.msra.mxu0 0.0
    %385 = vmatpush.msra.mxu0 0.0
    %386 = vmatpush.msra.mxu0 0.0
    %387 = vmatpush.msra.mxu0 0.0
    %388 = vmatpush.msra.mxu0 0.0
    %389 = vmatpush.msra.mxu0 0.0
    %390 = vmatpush.msra.mxu0 0.0
    %391 = vmatpush.msra.mxu0 0.0
    %392 = vmatpush.msra.mxu0 0.0
    %393 = vmatpush.msra.mxu0 0.0
    %394 = vmatpush.msra.mxu0 0.0
    %395 = vmatpush.msra.mxu0 0.0
    %396 = vmatpush.msra.mxu0 0.0
    %v397 = vand.u32 %v81, 4294901760
    %398 = vmatpush.msra.mxu0 %v397
    %v399 = vand.u32 %v77, 4294901760
    %400 = vmatpush.msra.mxu0 %v399
    %v401 = vand.u32 %v86, 4294901760
    %402 = vmatmul.f32.gmra.mxu0 %v401
    %v403 = vpop.f32.mrf.mxu0
    %v404 = vadd.f32 %v381, %v403
    %405 = vdwg.mxu0
    %406 = vmatpush.msra.mxu0 0.0
    %407 = vmatpush.msra.mxu0 0.0
    %408 = vmatpush.msra.mxu0 0.0
    %409 = vmatpush.msra.mxu0 0.0
    %410 = vmatpush.msra.mxu0 0.0
    %411 = vmatpush.msra.mxu0 0.0
    %412 = vmatpush.msra.mxu0 0.0
    %413 = vmatpush.msra.mxu0 0.0
    %414 = vmatpush.msra.mxu0 0.0
    %415 = vmatpush.msra.mxu0 0.0
    %416 = vmatpush.msra.mxu0 0.0
    %417 = vmatpush.msra.mxu0 0.0
    %418 = vmatpush.msra.mxu0 0.0
    %419 = vmatpush.msra.mxu0 0.0
    %v420 = vand.u32 %v82, 4294901760
    %421 = vmatpush.msra.mxu0 %v420
    %v422 = vand.u32 %v78, 4294901760
    %423 = vmatpush.msra.mxu0 %v422
    %v424 = vand.u32 %v86, 4294901760
    %v425 = vsub.f32 %v86, %v424
    %v426 = vand.u32 %v425, 4294901760
    %v427 = vsub.f32 %v425, %v426
    %v428 = vand.u32 %v427, 4294901760
    %429 = vmatmul.f32.gmra.mxu0 %v428
    %v430 = vpop.f32.mrf.mxu0
    %v431 = vadd.f32 0.0, %v430
    %432 = vdwg.mxu0
    %433 = vmatpush.msra.mxu0 0.0
    %434 = vmatpush.msra.mxu0 0.0
    %435 = vmatpush.msra.mxu0 0.0
    %436 = vmatpush.msra.mxu0 0.0
    %437 = vmatpush.msra.mxu0 0.0
    %438 = vmatpush.msra.mxu0 0.0
    %439 = vmatpush.msra.mxu0 0.0
    %440 = vmatpush.msra.mxu0 0.0
    %441 = vmatpush.msra.mxu0 0.0
    %442 = vmatpush.msra.mxu0 0.0
    %443 = vmatpush.msra.mxu0 0.0
    %444 = vmatpush.msra.mxu0 0.0
    %445 = vmatpush.msra.mxu0 0.0
    %446 = vmatpush.msra.mxu0 0.0
    %v447 = vand.u32 %v82, 4294901760
    %v448 = vsub.f32 %v82, %v447
    %v449 = vand.u32 %v448, 4294901760
    %v450 = vsub.f32 %v448, %v449
    %v451 = vand.u32 %v450, 4294901760
    %452 = vmatpush.msra.mxu0 %v451
    %v453 = vand.u32 %v78, 4294901760
    %v454 = vsub.f32 %v78, %v453
    %v455 = vand.u32 %v454, 4294901760
    %v456 = vsub.f32 %v454, %v455
    %v457 = vand.u32 %v456, 4294901760
    %458 = vmatpush.msra.mxu0 %v457
    %v459 = vand.u32 %v86, 4294901760
    %460 = vmatmul.f32.gmra.mxu0 %v459
    %v461 = vpop.f32.mrf.mxu0
    %v462 = vadd.f32 %v431, %v461
    %463 = vdwg.mxu0
    %464 = vmatpush.msra.mxu0 0.0
    %465 = vmatpush.msra.mxu0 0.0
    %466 = vmatpush.msra.mxu0 0.0
    %467 = vmatpush.msra.mxu0 0.0
    %468 = vmatpush.msra.mxu0 0.0
    %469 = vmatpush.msra.mxu0 0.0
    %470 = vmatpush.msra.mxu0 0.0
    %471 = vmatpush.msra.mxu0 0.0
    %472 = vmatpush.msra.mxu0 0.0
    %473 = vmatpush.msra.mxu0 0.0
    %474 = vmatpush.msra.mxu0 0.0
    %475 = vmatpush.msra.mxu0 0.0
    %476 = vmatpush.msra.mxu0 0.0
    %477 = vmatpush.msra.mxu0 0.0
    %v478 = vand.u32 %v82, 4294901760
    %v479 = vsub.f32 %v82, %v478
    %480 = vmatpush.msra.mxu0 %v479
    %v481 = vand.u32 %v78, 4294901760
    %v482 = vsub.f32 %v78, %v481
    %483 = vmatpush.msra.mxu0 %v482
    %v484 = vand.u32 %v86, 4294901760
    %v485 = vsub.f32 %v86, %v484
    %486 = vmatmul.f32.gmra.mxu0 %v485
    %v487 = vpop.f32.mrf.mxu0
    %v488 = vadd.f32 %v462, %v487
    %489 = vdwg.mxu0
    %490 = vmatpush.msra.mxu0 0.0
    %491 = vmatpush.msra.mxu0 0.0
    %492 = vmatpush.msra.mxu0 0.0
    %493 = vmatpush.msra.mxu0 0.0
    %494 = vmatpush.msra.mxu0 0.0
    %495 = vmatpush.msra.mxu0 0.0
    %496 = vmatpush.msra.mxu0 0.0
    %497 = vmatpush.msra.mxu0 0.0
    %498 = vmatpush.msra.mxu0 0.0
    %499 = vmatpush.msra.mxu0 0.0
    %500 = vmatpush.msra.mxu0 0.0
    %501 = vmatpush.msra.mxu0 0.0
    %502 = vmatpush.msra.mxu0 0.0
    %503 = vmatpush.msra.mxu0 0.0
    %v504 = vand.u32 %v82, 4294901760
    %505 = vmatpush.msra.mxu0 %v504
    %v506 = vand.u32 %v78, 4294901760
    %507 = vmatpush.msra.mxu0 %v506
    %v508 = vand.u32 %v86, 4294901760
    %v509 = vsub.f32 %v86, %v508
    %v510 = vand.u32 %v509, 4294901760
    %511 = vmatmul.f32.gmra.mxu0 %v510
    %v512 = vpop.f32.mrf.mxu0
    %v513 = vadd.f32 %v488, %v512
    %514 = vdwg.mxu0
    %515 = vmatpush.msra.mxu0 0.0
    %516 = vmatpush.msra.mxu0 0.0
    %517 = vmatpush.msra.mxu0 0.0
    %518 = vmatpush.msra.mxu0 0.0
    %519 = vmatpush.msra.mxu0 0.0
    %520 = vmatpush.msra.mxu0 0.0
    %521 = vmatpush.msra.mxu0 0.0
    %522 = vmatpush.msra.mxu0 0.0
    %523 = vmatpush.msra.mxu0 0.0
    %524 = vmatpush.msra.mxu0 0.0
    %525 = vmatpush.msra.mxu0 0.0
    %526 = vmatpush.msra.mxu0 0.0
    %527 = vmatpush.msra.mxu0 0.0
    %528 = vmatpush.msra.mxu0 0.0
    %v529 = vand.u32 %v82, 4294901760
    %v530 = vsub.f32 %v82, %v529
    %v531 = vand.u32 %v530, 4294901760
    %532 = vmatpush.msra.mxu0 %v531
    %v533 = vand.u32 %v78, 4294901760
    %v534 = vsub.f32 %v78, %v533
    %v535 = vand.u32 %v534, 4294901760
    %536 = vmatpush.msra.mxu0 %v535
    %v537 = vand.u32 %v86, 4294901760
    %538 = vmatmul.f32.gmra.mxu0 %v537
    %v539 = vpop.f32.mrf.mxu0
    %v540 = vadd.f32 %v513, %v539
    %541 = vdwg.mxu0
    %542 = vmatpush.msra.mxu0 0.0
    %543 = vmatpush.msra.mxu0 0.0
    %544 = vmatpush.msra.mxu0 0.0
    %545 = vmatpush.msra.mxu0 0.0
    %546 = vmatpush.msra.mxu0 0.0
    %547 = vmatpush.msra.mxu0 0.0
    %548 = vmatpush.msra.mxu0 0.0
    %549 = vmatpush.msra.mxu0 0.0
    %550 = vmatpush.msra.mxu0 0.0
    %551 = vmatpush.msra.mxu0 0.0
    %552 = vmatpush.msra.mxu0 0.0
    %553 = vmatpush.msra.mxu0 0.0
    %554 = vmatpush.msra.mxu0 0.0
    %555 = vmatpush.msra.mxu0 0.0
    %v556 = vand.u32 %v82, 4294901760
    %557 = vmatpush.msra.mxu0 %v556
    %v558 = vand.u32 %v78, 4294901760
    %559 = vmatpush.msra.mxu0 %v558
    %v560 = vand.u32 %v86, 4294901760
    %561 = vmatmul.f32.gmra.mxu0 %v560
    %v562 = vpop.f32.mrf.mxu0
    %v563 = vadd.f32 %v540, %v562
    %564 = vdwg.mxu0
    %565 = vmatpush.msra.mxu0 0.0
    %566 = vmatpush.msra.mxu0 0.0
    %567 = vmatpush.msra.mxu0 0.0
    %568 = vmatpush.msra.mxu0 0.0
    %569 = vmatpush.msra.mxu0 0.0
    %570 = vmatpush.msra.mxu0 0.0
    %571 = vmatpush.msra.mxu0 0.0
    %572 = vmatpush.msra.mxu0 0.0
    %573 = vmatpush.msra.mxu0 0.0
    %574 = vmatpush.msra.mxu0 0.0
    %575 = vmatpush.msra.mxu0 0.0
    %576 = vmatpush.msra.mxu0 0.0
    %577 = vmatpush.msra.mxu0 0.0
    %578 = vmatpush.msra.mxu0 0.0
    %v579 = vand.u32 %v83, 4294901760
    %580 = vmatpush.msra.mxu0 %v579
    %v581 = vand.u32 %v79, 4294901760
    %582 = vmatpush.msra.mxu0 %v581
    %v583 = vand.u32 %v86, 4294901760
    %v584 = vsub.f32 %v86, %v583
    %v585 = vand.u32 %v584, 4294901760
    %v586 = vsub.f32 %v584, %v585
    %v587 = vand.u32 %v586, 4294901760
    %588 = vmatmul.f32.gmra.mxu0 %v587
    %v589 = vpop.f32.mrf.mxu0
    %v590 = vadd.f32 0.0, %v589
    %591 = vdwg.mxu0
    %592 = vmatpush.msra.mxu0 0.0
    %593 = vmatpush.msra.mxu0 0.0
    %594 = vmatpush.msra.mxu0 0.0
    %595 = vmatpush.msra.mxu0 0.0
    %596 = vmatpush.msra.mxu0 0.0
    %597 = vmatpush.msra.mxu0 0.0
    %598 = vmatpush.msra.mxu0 0.0
    %599 = vmatpush.msra.mxu0 0.0
    %600 = vmatpush.msra.mxu0 0.0
    %601 = vmatpush.msra.mxu0 0.0
    %602 = vmatpush.msra.mxu0 0.0
    %603 = vmatpush.msra.mxu0 0.0
    %604 = vmatpush.msra.mxu0 0.0
    %605 = vmatpush.msra.mxu0 0.0
    %v606 = vand.u32 %v83, 4294901760
    %v607 = vsub.f32 %v83, %v606
    %v608 = vand.u32 %v607, 4294901760
    %v609 = vsub.f32 %v607, %v608
    %v610 = vand.u32 %v609, 4294901760
    %611 = vmatpush.msra.mxu0 %v610
    %v612 = vand.u32 %v79, 4294901760
    %v613 = vsub.f32 %v79, %v612
    %v614 = vand.u32 %v613, 4294901760
    %v615 = vsub.f32 %v613, %v614
    %v616 = vand.u32 %v615, 4294901760
    %617 = vmatpush.msra.mxu0 %v616
    %v618 = vand.u32 %v86, 4294901760
    %619 = vmatmul.f32.gmra.mxu0 %v618
    %v620 = vpop.f32.mrf.mxu0
    %v621 = vadd.f32 %v590, %v620
    %622 = vdwg.mxu0
    %623 = vmatpush.msra.mxu0 0.0
    %624 = vmatpush.msra.mxu0 0.0
    %625 = vmatpush.msra.mxu0 0.0
    %626 = vmatpush.msra.mxu0 0.0
    %627 = vmatpush.msra.mxu0 0.0
    %628 = vmatpush.msra.mxu0 0.0
    %629 = vmatpush.msra.mxu0 0.0
    %630 = vmatpush.msra.mxu0 0.0
    %631 = vmatpush.msra.mxu0 0.0
    %632 = vmatpush.msra.mxu0 0.0
    %633 = vmatpush.msra.mxu0 0.0
    %634 = vmatpush.msra.mxu0 0.0
    %635 = vmatpush.msra.mxu0 0.0
    %636 = vmatpush.msra.mxu0 0.0
    %v637 = vand.u32 %v83, 4294901760
    %v638 = vsub.f32 %v83, %v637
    %639 = vmatpush.msra.mxu0 %v638
    %v640 = vand.u32 %v79, 4294901760
    %v641 = vsub.f32 %v79, %v640
    %642 = vmatpush.msra.mxu0 %v641
    %v643 = vand.u32 %v86, 4294901760
    %v644 = vsub.f32 %v86, %v643
    %645 = vmatmul.f32.gmra.mxu0 %v644
    %v646 = vpop.f32.mrf.mxu0
    %v647 = vadd.f32 %v621, %v646
    %648 = vdwg.mxu0
    %649 = vmatpush.msra.mxu0 0.0
    %650 = vmatpush.msra.mxu0 0.0
    %651 = vmatpush.msra.mxu0 0.0
    %652 = vmatpush.msra.mxu0 0.0
    %653 = vmatpush.msra.mxu0 0.0
    %654 = vmatpush.msra.mxu0 0.0
    %655 = vmatpush.msra.mxu0 0.0
    %656 = vmatpush.msra.mxu0 0.0
    %657 = vmatpush.msra.mxu0 0.0
    %658 = vmatpush.msra.mxu0 0.0
    %659 = vmatpush.msra.mxu0 0.0
    %660 = vmatpush.msra.mxu0 0.0
    %661 = vmatpush.msra.mxu0 0.0
    %662 = vmatpush.msra.mxu0 0.0
    %v663 = vand.u32 %v83, 4294901760
    %664 = vmatpush.msra.mxu0 %v663
    %v665 = vand.u32 %v79, 4294901760
    %666 = vmatpush.msra.mxu0 %v665
    %v667 = vand.u32 %v86, 4294901760
    %v668 = vsub.f32 %v86, %v667
    %v669 = vand.u32 %v668, 4294901760
    %670 = vmatmul.f32.gmra.mxu0 %v669
    %v671 = vpop.f32.mrf.mxu0
    %v672 = vadd.f32 %v647, %v671
    %673 = vdwg.mxu0
    %674 = vmatpush.msra.mxu0 0.0
    %675 = vmatpush.msra.mxu0 0.0
    %676 = vmatpush.msra.mxu0 0.0
    %677 = vmatpush.msra.mxu0 0.0
    %678 = vmatpush.msra.mxu0 0.0
    %679 = vmatpush.msra.mxu0 0.0
    %680 = vmatpush.msra.mxu0 0.0
    %681 = vmatpush.msra.mxu0 0.0
    %682 = vmatpush.msra.mxu0 0.0
    %683 = vmatpush.msra.mxu0 0.0
    %684 = vmatpush.msra.mxu0 0.0
    %685 = vmatpush.msra.mxu0 0.0
    %686 = vmatpush.msra.mxu0 0.0
    %687 = vmatpush.msra.mxu0 0.0
    %v688 = vand.u32 %v83, 4294901760
    %v689 = vsub.f32 %v83, %v688
    %v690 = vand.u32 %v689, 4294901760
    %691 = vmatpush.msra.mxu0 %v690
    %v692 = vand.u32 %v79, 4294901760
    %v693 = vsub.f32 %v79, %v692
    %v694 = vand.u32 %v693, 4294901760
    %695 = vmatpush.msra.mxu0 %v694
    %v696 = vand.u32 %v86, 4294901760
    %697 = vmatmul.f32.gmra.mxu0 %v696
    %v698 = vpop.f32.mrf.mxu0
    %v699 = vadd.f32 %v672, %v698
    %700 = vdwg.mxu0
    %701 = vmatpush.msra.mxu0 0.0
    %702 = vmatpush.msra.mxu0 0.0
    %703 = vmatpush.msra.mxu0 0.0
    %704 = vmatpush.msra.mxu0 0.0
    %705 = vmatpush.msra.mxu0 0.0
    %706 = vmatpush.msra.mxu0 0.0
    %707 = vmatpush.msra.mxu0 0.0
    %708 = vmatpush.msra.mxu0 0.0
    %709 = vmatpush.msra.mxu0 0.0
    %710 = vmatpush.msra.mxu0 0.0
    %711 = vmatpush.msra.mxu0 0.0
    %712 = vmatpush.msra.mxu0 0.0
    %713 = vmatpush.msra.mxu0 0.0
    %714 = vmatpush.msra.mxu0 0.0
    %v715 = vand.u32 %v83, 4294901760
    %716 = vmatpush.msra.mxu0 %v715
    %v717 = vand.u32 %v79, 4294901760
    %718 = vmatpush.msra.mxu0 %v717
    %v719 = vand.u32 %v86, 4294901760
    %720 = vmatmul.f32.gmra.mxu0 %v719
    %v721 = vpop.f32.mrf.mxu0
    %v722 = vadd.f32 %v699, %v721
    %723 = vdwg.mxu0
    %v724 = vld [vmem:[#allocation7] sm:$0xf]
    %v726 = vperm.slane %v724, 0
    %v727 = vperm.slane %v724, 1
    %v728 = vperm.slane %v724, 2
    %v729 = vperm.slane %v724, 3
    %v734 = vmul.f32 %v245, %v726
    %v735 = vmul.f32 %v404, %v727
    %v736 = vmul.f32 %v563, %v728
    %v737 = vmul.f32 %v722, %v729
    %v738 = vld [vmem:[#allocation8] sm:$0xf]
    %v740 = vperm.slane %v738, 0
    %v741 = vperm.slane %v738, 1
    %v742 = vperm.slane %v738, 2
    %v743 = vperm.slane %v738, 3
    %v748 = vadd.f32 %v734, %v740
    %v749 = vadd.f32 %v735, %v741
    %v750 = vadd.f32 %v736, %v742
    %v751 = vadd.f32 %v737, %v743
    %v752 = vand.u32 2147483647, %v748
    %vm753 = vcmp.le.f32.partialorder %v752, 0.7853982
    %vm754 = vcmp.lt.s32.totalorder %v748, 0
    %v755 = vand.u32 %v748, 2139095040
    %v756 = vshrl.u32 %v755, 23
    %v757 = vsub.s32 %v756, 127
    %v758 = vand.u32 2147483647, %v748
    %v759 = vand.u32 %v758, 8388607
    %v760 = vor.u32 %v759, 8388608
    %v761 = vsub.s32 0, %v760
    %v762 = vadd.s32 %v757, 1
    %vm763 = vcmp.gt.s32.totalorder %v762, 0
    %v764 = vsel %vm763, %v762, 0
    %v765 = vshrl.u32 %v764, 5
    %v766 = vand.u32 %v764, 31
    %v767 = vsub.s32 32, %v766
    %v768 = vshrl.u32 683565275, %v767
    %v769 = vshll.u32 683565275, %v766
    %v770 = vshrl.u32 2475754826, %v767
    %v771 = vor.u32 %v769, %v770
    %v772 = vshll.u32 2475754826, %v766
    %v773 = vshrl.u32 2131351028, %v767
    %v774 = vor.u32 %v772, %v773
    %v775 = vshll.u32 2131351028, %v766
    %v776 = vshrl.u32 2102212464, %v767
    %v777 = vor.u32 %v775, %v776
    %v778 = vshll.u32 2102212464, %v766
    %v779 = vshrl.u32 920167782, %v767
    %v780 = vor.u32 %v778, %v779
    %v781 = vshll.u32 920167782, %v766
    %v782 = vshrl.u32 1326507024, %v767
    %v783 = vor.u32 %v781, %v782
    %vm784 = vcmp.lt.s32.totalorder %v765, 1
    %vm785 = vcmp.lt.s32.totalorder %v765, 2
    %vm786 = vcmp.lt.s32.totalorder %v765, 3
    %vm787 = vcmp.lt.s32.totalorder %v765, 4
    %v788 = vsel %vm784, %v768, %v771
    %v789 = vsel %vm787, %v777, 2102212464
    %v790 = vsel %vm786, %v774, %v789
    %v791 = vsel %vm785, %v788, %v790
    %v792 = vsel %vm784, %v771, %v774
    %v793 = vsel %vm787, %v780, 920167782
    %v794 = vsel %vm786, %v777, %v793
    %v795 = vsel %vm785, %v792, %v794
    %v796 = vsel %vm784, %v774, %v777
    %v797 = vsel %vm787, %v783, 1326507024
    %v798 = vsel %vm786, %v780, %v797
    %v799 = vsel %vm785, %v796, %v798
    %v800 = vshll.u32 %v760, 8
    %v801 = vand.u32 %v800, 65535
    %v802 = vshrl.u32 %v800, 16
    %v803 = vand.u32 %v799, 65535
    %v804 = vshrl.u32 %v799, 16
    %v805 = vmul.u32 %v801, %v803
    %v806 = vmul.u32 %v801, %v804
    %v807 = vmul.u32 %v802, %v803
    %v808 = vmul.u32 %v802, %v804
    %v809 = vshll.u32 %v806, 16
    %v810 = vshrl.u32 %v806, 16
    %v811 = vshll.u32 %v807, 16
    %v812 = vshrl.u32 %v807, 16
    %vm813 = vc.u32 %v805, %v809
    %v814 = vsel %vm813, 1, 0
    %v815 = vadd.s32 %v805, %v809
    %v816 = vadd.s32 %v808, %v814
    %vm817 = vc.u32 %v815, %v811
    %v818 = vsel %vm817, 1, 0
    %v819 = vadd.s32 %v815, %v811
    %v820 = vadd.s32 %v816, %v818
    %v821 = vadd.s32 %v820, %v810
    %v822 = vadd.s32 %v821, %v812
    %v823 = vand.u32 %v800, 65535
    %v824 = vshrl.u32 %v800, 16
    %v825 = vand.u32 %v795, 65535
    %v826 = vshrl.u32 %v795, 16
    %v827 = vmul.u32 %v823, %v825
    %v828 = vmul.u32 %v823, %v826
    %v829 = vmul.u32 %v824, %v825
    %v830 = vmul.u32 %v824, %v826
    %v831 = vshll.u32 %v828, 16
    %v832 = vshrl.u32 %v828, 16
    %v833 = vshll.u32 %v829, 16
    %v834 = vshrl.u32 %v829, 16
    %vm835 = vc.u32 %v827, %v831
    %v836 = vsel %vm835, 1, 0
    %v837 = vadd.s32 %v827, %v831
    %v838 = vadd.s32 %v830, %v836
    %vm839 = vc.u32 %v837, %v833
    %v840 = vsel %vm839, 1, 0
    %v841 = vadd.s32 %v837, %v833
    %v842 = vadd.s32 %v838, %v840
    %v843 = vadd.s32 %v842, %v832
    %v844 = vadd.s32 %v843, %v834
    %v845 = vmul.u32 %v800, %v791
    %v846 = vadd.s32 %v822, %v841
    %vm847 = vc.u32 %v822, %v841
    %v848 = vadd.s32 %v844, 1
    %v849 = vsel %vm847, %v848, %v844
    %v850 = vadd.s32 %v845, %v849
    %v851 = vadd.s32 %v850, 536870912
    %v852 = vshrl.u32 %v851, 30
    %v853 = vshll.u32 %v852, 30
    %v854 = vsub.s32 %v850, %v853
    %vm855 = vcmp.lt.s32.totalorder %v854, 0
    %v856 = vsub.s32 0, %v854
    %v857 = vsel %vm855, %v856, %v854
    %v858 = vclz %v857
    %v859 = vsub.s32 %v858, 2
    %vm860 = vcmp.gt.s32.totalorder 0, %v859
    %v861 = vsel %vm860, 0, %v859
    %v862 = vsub.s32 32, %v861
    %v863 = vshll.u32 %v854, %v861
    %v864 = vshrl.u32 %v846, %v862
    %v865 = vor.u32 %v863, %v864
    %v866 = vsub.s32 4294967266, %v861
    %v867 = vadd.s32 %v866, 127
    %v868 = vshll.u32 %v867, 23
    %v869 = vor.u32 4788187, %v868
    %v870 = vand.u32 2147483647, %v869
    %v872 = vcvt.s32.f32 %v865
    %v873 = vmul.f32 %v872, %v870
    %v874 = vxor.u32 %v873, 2147483648
    %v875 = vsel %vm754, %v874, %v873
    %v876 = vsub.s32 4, %v852
    %v877 = vsel %vm754, %v876, %v852
    %v878 = vsel %vm753, %v748, %v875
    %v879 = vsel %vm753, 0, %v877
    %v880 = vmul.f32 %v878, %v878
    %v881 = vmul.f32 %v880, -0.001358992
    %v882 = vadd.f32 %v881, 0.041655596
    %v883 = vmul.f32 %v880, %v882
    %v884 = vadd.f32 %v883, -0.4999988
    %v885 = vmul.f32 %v880, %v884
    %v886 = vadd.f32 1.0, %v885
    %v887 = vmul.f32 %v878, %v878
    %v888 = vmul.f32 %v887, -0.00019511016
    %v889 = vadd.f32 %v888, 0.008332121
    %v890 = vmul.f32 %v887, %v889
    %v891 = vadd.f32 %v890, -0.16666654
    %v892 = vmul.f32 %v887, %v891
    %v893 = vadd.f32 %v892, 1.0
    %v894 = vmul.f32 %v893, %v878
    %vm895 = vweird.f32 %v748
    %v896 = vand.u32 %v879, 3
    %vm897 = vcmp.lt.s32.totalorder %v896, 2
    %vm898 = vcmp.eq.s32.totalorder %v896, 0
    %v899 = vxor.u32 %v894, 2147483648
    %v900 = vsel %vm898, %v886, %v899
    %vm901 = vcmp.eq.s32.totalorder %v896, 2
    %v902 = vxor.u32 %v886, 2147483648
    %v903 = vsel %vm901, %v902, %v894
    %v904 = vsel %vm897, %v900, %v903
    %v905 = vsel %vm895, nan, %v904
    %v906 = vand.u32 2147483647, %v749
    %vm907 = vcmp.le.f32.partialorder %v906, 0.7853982
    %vm908 = vcmp.lt.s32.totalorder %v749, 0
    %v909 = vand.u32 %v749, 2139095040
    %v910 = vshrl.u32 %v909, 23
    %v911 = vsub.s32 %v910, 127
    %v912 = vand.u32 2147483647, %v749
    %v913 = vand.u32 %v912, 8388607
    %v914 = vor.u32 %v913, 8388608
    %v915 = vsub.s32 0, %v914
    %v916 = vadd.s32 %v911, 1
    %vm917 = vcmp.gt.s32.totalorder %v916, 0
    %v918 = vsel %vm917, %v916, 0
    %v919 = vshrl.u32 %v918, 5
    %v920 = vand.u32 %v918, 31
    %v921 = vsub.s32 32, %v920
    %v922 = vshrl.u32 683565275, %v921
    %v923 = vshll.u32 683565275, %v920
    %v924 = vshrl.u32 2475754826, %v921
    %v925 = vor.u32 %v923, %v924
    %v926 = vshll.u32 2475754826, %v920
    %v927 = vshrl.u32 2131351028, %v921
    %v928 = vor.u32 %v926, %v927
    %v929 = vshll.u32 2131351028, %v920
    %v930 = vshrl.u32 2102212464, %v921
    %v931 = vor.u32 %v929, %v930
    %v932 = vshll.u32 2102212464, %v920
    %v933 = vshrl.u32 920167782, %v921
    %v934 = vor.u32 %v932, %v933
    %v935 = vshll.u32 920167782, %v920
    %v936 = vshrl.u32 1326507024, %v921
    %v937 = vor.u32 %v935, %v936
    %vm938 = vcmp.lt.s32.totalorder %v919, 1
    %vm939 = vcmp.lt.s32.totalorder %v919, 2
    %vm940 = vcmp.lt.s32.totalorder %v919, 3
    %vm941 = vcmp.lt.s32.totalorder %v919, 4
    %v942 = vsel %vm938, %v922, %v925
    %v943 = vsel %vm941, %v931, 2102212464
    %v944 = vsel %vm940, %v928, %v943
    %v945 = vsel %vm939, %v942, %v944
    %v946 = vsel %vm938, %v925, %v928
    %v947 = vsel %vm941, %v934, 920167782
    %v948 = vsel %vm940, %v931, %v947
    %v949 = vsel %vm939, %v946, %v948
    %v950 = vsel %vm938, %v928, %v931
    %v951 = vsel %vm941, %v937, 1326507024
    %v952 = vsel %vm940, %v934, %v951
    %v953 = vsel %vm939, %v950, %v952
    %v954 = vshll.u32 %v914, 8
    %v955 = vand.u32 %v954, 65535
    %v956 = vshrl.u32 %v954, 16
    %v957 = vand.u32 %v953, 65535
    %v958 = vshrl.u32 %v953, 16
    %v959 = vmul.u32 %v955, %v957
    %v960 = vmul.u32 %v955, %v958
    %v961 = vmul.u32 %v956, %v957
    %v962 = vmul.u32 %v956, %v958
    %v963 = vshll.u32 %v960, 16
    %v964 = vshrl.u32 %v960, 16
    %v965 = vshll.u32 %v961, 16
    %v966 = vshrl.u32 %v961, 16
    %vm967 = vc.u32 %v959, %v963
    %v968 = vsel %vm967, 1, 0
    %v969 = vadd.s32 %v959, %v963
    %v970 = vadd.s32 %v962, %v968
    %vm971 = vc.u32 %v969, %v965
    %v972 = vsel %vm971, 1, 0
    %v973 = vadd.s32 %v969, %v965
    %v974 = vadd.s32 %v970, %v972
    %v975 = vadd.s32 %v974, %v964
    %v976 = vadd.s32 %v975, %v966
    %v977 = vand.u32 %v954, 65535
    %v978 = vshrl.u32 %v954, 16
    %v979 = vand.u32 %v949, 65535
    %v980 = vshrl.u32 %v949, 16
    %v981 = vmul.u32 %v977, %v979
    %v982 = vmul.u32 %v977, %v980
    %v983 = vmul.u32 %v978, %v979
    %v984 = vmul.u32 %v978, %v980
    %v985 = vshll.u32 %v982, 16
    %v986 = vshrl.u32 %v982, 16
    %v987 = vshll.u32 %v983, 16
    %v988 = vshrl.u32 %v983, 16
    %vm989 = vc.u32 %v981, %v985
    %v990 = vsel %vm989, 1, 0
    %v991 = vadd.s32 %v981, %v985
    %v992 = vadd.s32 %v984, %v990
    %vm993 = vc.u32 %v991, %v987
    %v994 = vsel %vm993, 1, 0
    %v995 = vadd.s32 %v991, %v987
    %v996 = vadd.s32 %v992, %v994
    %v997 = vadd.s32 %v996, %v986
    %v998 = vadd.s32 %v997, %v988
    %v999 = vmul.u32 %v954, %v945
    %v1000 = vadd.s32 %v976, %v995
    %vm1001 = vc.u32 %v976, %v995
    %v1002 = vadd.s32 %v998, 1
    %v1003 = vsel %vm1001, %v1002, %v998
    %v1004 = vadd.s32 %v999, %v1003
    %v1005 = vadd.s32 %v1004, 536870912
    %v1006 = vshrl.u32 %v1005, 30
    %v1007 = vshll.u32 %v1006, 30
    %v1008 = vsub.s32 %v1004, %v1007
    %vm1009 = vcmp.lt.s32.totalorder %v1008, 0
    %v1010 = vsub.s32 0, %v1008
    %v1011 = vsel %vm1009, %v1010, %v1008
    %v1012 = vclz %v1011
    %v1013 = vsub.s32 %v1012, 2
    %vm1014 = vcmp.gt.s32.totalorder 0, %v1013
    %v1015 = vsel %vm1014, 0, %v1013
    %v1016 = vsub.s32 32, %v1015
    %v1017 = vshll.u32 %v1008, %v1015
    %v1018 = vshrl.u32 %v1000, %v1016
    %v1019 = vor.u32 %v1017, %v1018
    %v1020 = vsub.s32 4294967266, %v1015
    %v1021 = vadd.s32 %v1020, 127
    %v1022 = vshll.u32 %v1021, 23
    %v1023 = vor.u32 4788187, %v1022
    %v1024 = vand.u32 2147483647, %v1023
    %v1026 = vcvt.s32.f32 %v1019
    %v1027 = vmul.f32 %v1026, %v1024
    %v1028 = vxor.u32 %v1027, 2147483648
    %v1029 = vsel %vm908, %v1028, %v1027
    %v1030 = vsub.s32 4, %v1006
    %v1031 = vsel %vm908, %v1030, %v1006
    %v1032 = vsel %vm907, %v749, %v1029
    %v1033 = vsel %vm907, 0, %v1031
    %v1034 = vmul.f32 %v1032, %v1032
    %v1035 = vmul.f32 %v1034, -0.001358992
    %v1036 = vadd.f32 %v1035, 0.041655596
    %v1037 = vmul.f32 %v1034, %v1036
    %v1038 = vadd.f32 %v1037, -0.4999988
    %v1039 = vmul.f32 %v1034, %v1038
    %v1040 = vadd.f32 1.0, %v1039
    %v1041 = vmul.f32 %v1032, %v1032
    %v1042 = vmul.f32 %v1041, -0.00019511016
    %v1043 = vadd.f32 %v1042, 0.008332121
    %v1044 = vmul.f32 %v1041, %v1043
    %v1045 = vadd.f32 %v1044, -0.16666654
    %v1046 = vmul.f32 %v1041, %v1045
    %v1047 = vadd.f32 %v1046, 1.0
    %v1048 = vmul.f32 %v1047, %v1032
    %vm1049 = vweird.f32 %v749
    %v1050 = vand.u32 %v1033, 3
    %vm1051 = vcmp.lt.s32.totalorder %v1050, 2
    %vm1052 = vcmp.eq.s32.totalorder %v1050, 0
    %v1053 = vxor.u32 %v1048, 2147483648
    %v1054 = vsel %vm1052, %v1040, %v1053
    %vm1055 = vcmp.eq.s32.totalorder %v1050, 2
    %v1056 = vxor.u32 %v1040, 2147483648
    %v1057 = vsel %vm1055, %v1056, %v1048
    %v1058 = vsel %vm1051, %v1054, %v1057
    %v1059 = vsel %vm1049, nan, %v1058
    %v1060 = vand.u32 2147483647, %v750
    %vm1061 = vcmp.le.f32.partialorder %v1060, 0.7853982
    %vm1062 = vcmp.lt.s32.totalorder %v750, 0
    %v1063 = vand.u32 %v750, 2139095040
    %v1064 = vshrl.u32 %v1063, 23
    %v1065 = vsub.s32 %v1064, 127
    %v1066 = vand.u32 2147483647, %v750
    %v1067 = vand.u32 %v1066, 8388607
    %v1068 = vor.u32 %v1067, 8388608
    %v1069 = vsub.s32 0, %v1068
    %v1070 = vadd.s32 %v1065, 1
    %vm1071 = vcmp.gt.s32.totalorder %v1070, 0
    %v1072 = vsel %vm1071, %v1070, 0
    %v1073 = vshrl.u32 %v1072, 5
    %v1074 = vand.u32 %v1072, 31
    %v1075 = vsub.s32 32, %v1074
    %v1076 = vshrl.u32 683565275, %v1075
    %v1077 = vshll.u32 683565275, %v1074
    %v1078 = vshrl.u32 2475754826, %v1075
    %v1079 = vor.u32 %v1077, %v1078
    %v1080 = vshll.u32 2475754826, %v1074
    %v1081 = vshrl.u32 2131351028, %v1075
    %v1082 = vor.u32 %v1080, %v1081
    %v1083 = vshll.u32 2131351028, %v1074
    %v1084 = vshrl.u32 2102212464, %v1075
    %v1085 = vor.u32 %v1083, %v1084
    %v1086 = vshll.u32 2102212464, %v1074
    %v1087 = vshrl.u32 920167782, %v1075
    %v1088 = vor.u32 %v1086, %v1087
    %v1089 = vshll.u32 920167782, %v1074
    %v1090 = vshrl.u32 1326507024, %v1075
    %v1091 = vor.u32 %v1089, %v1090
    %vm1092 = vcmp.lt.s32.totalorder %v1073, 1
    %vm1093 = vcmp.lt.s32.totalorder %v1073, 2
    %vm1094 = vcmp.lt.s32.totalorder %v1073, 3
    %vm1095 = vcmp.lt.s32.totalorder %v1073, 4
    %v1096 = vsel %vm1092, %v1076, %v1079
    %v1097 = vsel %vm1095, %v1085, 2102212464
    %v1098 = vsel %vm1094, %v1082, %v1097
    %v1099 = vsel %vm1093, %v1096, %v1098
    %v1100 = vsel %vm1092, %v1079, %v1082
    %v1101 = vsel %vm1095, %v1088, 920167782
    %v1102 = vsel %vm1094, %v1085, %v1101
    %v1103 = vsel %vm1093, %v1100, %v1102
    %v1104 = vsel %vm1092, %v1082, %v1085
    %v1105 = vsel %vm1095, %v1091, 1326507024
    %v1106 = vsel %vm1094, %v1088, %v1105
    %v1107 = vsel %vm1093, %v1104, %v1106
    %v1108 = vshll.u32 %v1068, 8
    %v1109 = vand.u32 %v1108, 65535
    %v1110 = vshrl.u32 %v1108, 16
    %v1111 = vand.u32 %v1107, 65535
    %v1112 = vshrl.u32 %v1107, 16
    %v1113 = vmul.u32 %v1109, %v1111
    %v1114 = vmul.u32 %v1109, %v1112
    %v1115 = vmul.u32 %v1110, %v1111
    %v1116 = vmul.u32 %v1110, %v1112
    %v1117 = vshll.u32 %v1114, 16
    %v1118 = vshrl.u32 %v1114, 16
    %v1119 = vshll.u32 %v1115, 16
    %v1120 = vshrl.u32 %v1115, 16
    %vm1121 = vc.u32 %v1113, %v1117
    %v1122 = vsel %vm1121, 1, 0
    %v1123 = vadd.s32 %v1113, %v1117
    %v1124 = vadd.s32 %v1116, %v1122
    %vm1125 = vc.u32 %v1123, %v1119
    %v1126 = vsel %vm1125, 1, 0
    %v1127 = vadd.s32 %v1123, %v1119
    %v1128 = vadd.s32 %v1124, %v1126
    %v1129 = vadd.s32 %v1128, %v1118
    %v1130 = vadd.s32 %v1129, %v1120
    %v1131 = vand.u32 %v1108, 65535
    %v1132 = vshrl.u32 %v1108, 16
    %v1133 = vand.u32 %v1103, 65535
    %v1134 = vshrl.u32 %v1103, 16
    %v1135 = vmul.u32 %v1131, %v1133
    %v1136 = vmul.u32 %v1131, %v1134
    %v1137 = vmul.u32 %v1132, %v1133
    %v1138 = vmul.u32 %v1132, %v1134
    %v1139 = vshll.u32 %v1136, 16
    %v1140 = vshrl.u32 %v1136, 16
    %v1141 = vshll.u32 %v1137, 16
    %v1142 = vshrl.u32 %v1137, 16
    %vm1143 = vc.u32 %v1135, %v1139
    %v1144 = vsel %vm1143, 1, 0
    %v1145 = vadd.s32 %v1135, %v1139
    %v1146 = vadd.s32 %v1138, %v1144
    %vm1147 = vc.u32 %v1145, %v1141
    %v1148 = vsel %vm1147, 1, 0
    %v1149 = vadd.s32 %v1145, %v1141
    %v1150 = vadd.s32 %v1146, %v1148
    %v1151 = vadd.s32 %v1150, %v1140
    %v1152 = vadd.s32 %v1151, %v1142
    %v1153 = vmul.u32 %v1108, %v1099
    %v1154 = vadd.s32 %v1130, %v1149
    %vm1155 = vc.u32 %v1130, %v1149
    %v1156 = vadd.s32 %v1152, 1
    %v1157 = vsel %vm1155, %v1156, %v1152
    %v1158 = vadd.s32 %v1153, %v1157
    %v1159 = vadd.s32 %v1158, 536870912
    %v1160 = vshrl.u32 %v1159, 30
    %v1161 = vshll.u32 %v1160, 30
    %v1162 = vsub.s32 %v1158, %v1161
    %vm1163 = vcmp.lt.s32.totalorder %v1162, 0
    %v1164 = vsub.s32 0, %v1162
    %v1165 = vsel %vm1163, %v1164, %v1162
    %v1166 = vclz %v1165
    %v1167 = vsub.s32 %v1166, 2
    %vm1168 = vcmp.gt.s32.totalorder 0, %v1167
    %v1169 = vsel %vm1168, 0, %v1167
    %v1170 = vsub.s32 32, %v1169
    %v1171 = vshll.u32 %v1162, %v1169
    %v1172 = vshrl.u32 %v1154, %v1170
    %v1173 = vor.u32 %v1171, %v1172
    %v1174 = vsub.s32 4294967266, %v1169
    %v1175 = vadd.s32 %v1174, 127
    %v1176 = vshll.u32 %v1175, 23
    %v1177 = vor.u32 4788187, %v1176
    %v1178 = vand.u32 2147483647, %v1177
    %v1180 = vcvt.s32.f32 %v1173
    %v1181 = vmul.f32 %v1180, %v1178
    %v1182 = vxor.u32 %v1181, 2147483648
    %v1183 = vsel %vm1062, %v1182, %v1181
    %v1184 = vsub.s32 4, %v1160
    %v1185 = vsel %vm1062, %v1184, %v1160
    %v1186 = vsel %vm1061, %v750, %v1183
    %v1187 = vsel %vm1061, 0, %v1185
    %v1188 = vmul.f32 %v1186, %v1186
    %v1189 = vmul.f32 %v1188, -0.001358992
    %v1190 = vadd.f32 %v1189, 0.041655596
    %v1191 = vmul.f32 %v1188, %v1190
    %v1192 = vadd.f32 %v1191, -0.4999988
    %v1193 = vmul.f32 %v1188, %v1192
    %v1194 = vadd.f32 1.0, %v1193
    %v1195 = vmul.f32 %v1186, %v1186
    %v1196 = vmul.f32 %v1195, -0.00019511016
    %v1197 = vadd.f32 %v1196, 0.008332121
    %v1198 = vmul.f32 %v1195, %v1197
    %v1199 = vadd.f32 %v1198, -0.16666654
    %v1200 = vmul.f32 %v1195, %v1199
    %v1201 = vadd.f32 %v1200, 1.0
    %v1202 = vmul.f32 %v1201, %v1186
    %vm1203 = vweird.f32 %v750
    %v1204 = vand.u32 %v1187, 3
    %vm1205 = vcmp.lt.s32.totalorder %v1204, 2
    %vm1206 = vcmp.eq.s32.totalorder %v1204, 0
    %v1207 = vxor.u32 %v1202, 2147483648
    %v1208 = vsel %vm1206, %v1194, %v1207
    %vm1209 = vcmp.eq.s32.totalorder %v1204, 2
    %v1210 = vxor.u32 %v1194, 2147483648
    %v1211 = vsel %vm1209, %v1210, %v1202
    %v1212 = vsel %vm1205, %v1208, %v1211
    %v1213 = vsel %vm1203, nan, %v1212
    %v1214 = vand.u32 2147483647, %v751
    %vm1215 = vcmp.le.f32.partialorder %v1214, 0.7853982
    %vm1216 = vcmp.lt.s32.totalorder %v751, 0
    %v1217 = vand.u32 %v751, 2139095040
    %v1218 = vshrl.u32 %v1217, 23
    %v1219 = vsub.s32 %v1218, 127
    %v1220 = vand.u32 2147483647, %v751
    %v1221 = vand.u32 %v1220, 8388607
    %v1222 = vor.u32 %v1221, 8388608
    %v1223 = vsub.s32 0, %v1222
    %v1224 = vadd.s32 %v1219, 1
    %vm1225 = vcmp.gt.s32.totalorder %v1224, 0
    %v1226 = vsel %vm1225, %v1224, 0
    %v1227 = vshrl.u32 %v1226, 5
    %v1228 = vand.u32 %v1226, 31
    %v1229 = vsub.s32 32, %v1228
    %v1230 = vshrl.u32 683565275, %v1229
    %v1231 = vshll.u32 683565275, %v1228
    %v1232 = vshrl.u32 2475754826, %v1229
    %v1233 = vor.u32 %v1231, %v1232
    %v1234 = vshll.u32 2475754826, %v1228
    %v1235 = vshrl.u32 2131351028, %v1229
    %v1236 = vor.u32 %v1234, %v1235
    %v1237 = vshll.u32 2131351028, %v1228
    %v1238 = vshrl.u32 2102212464, %v1229
    %v1239 = vor.u32 %v1237, %v1238
    %v1240 = vshll.u32 2102212464, %v1228
    %v1241 = vshrl.u32 920167782, %v1229
    %v1242 = vor.u32 %v1240, %v1241
    %v1243 = vshll.u32 920167782, %v1228
    %v1244 = vshrl.u32 1326507024, %v1229
    %v1245 = vor.u32 %v1243, %v1244
    %vm1246 = vcmp.lt.s32.totalorder %v1227, 1
    %vm1247 = vcmp.lt.s32.totalorder %v1227, 2
    %vm1248 = vcmp.lt.s32.totalorder %v1227, 3
    %vm1249 = vcmp.lt.s32.totalorder %v1227, 4
    %v1250 = vsel %vm1246, %v1230, %v1233
    %v1251 = vsel %vm1249, %v1239, 2102212464
    %v1252 = vsel %vm1248, %v1236, %v1251
    %v1253 = vsel %vm1247, %v1250, %v1252
    %v1254 = vsel %vm1246, %v1233, %v1236
    %v1255 = vsel %vm1249, %v1242, 920167782
    %v1256 = vsel %vm1248, %v1239, %v1255
    %v1257 = vsel %vm1247, %v1254, %v1256
    %v1258 = vsel %vm1246, %v1236, %v1239
    %v1259 = vsel %vm1249, %v1245, 1326507024
    %v1260 = vsel %vm1248, %v1242, %v1259
    %v1261 = vsel %vm1247, %v1258, %v1260
    %v1262 = vshll.u32 %v1222, 8
    %v1263 = vand.u32 %v1262, 65535
    %v1264 = vshrl.u32 %v1262, 16
    %v1265 = vand.u32 %v1261, 65535
    %v1266 = vshrl.u32 %v1261, 16
    %v1267 = vmul.u32 %v1263, %v1265
    %v1268 = vmul.u32 %v1263, %v1266
    %v1269 = vmul.u32 %v1264, %v1265
    %v1270 = vmul.u32 %v1264, %v1266
    %v1271 = vshll.u32 %v1268, 16
    %v1272 = vshrl.u32 %v1268, 16
    %v1273 = vshll.u32 %v1269, 16
    %v1274 = vshrl.u32 %v1269, 16
    %vm1275 = vc.u32 %v1267, %v1271
    %v1276 = vsel %vm1275, 1, 0
    %v1277 = vadd.s32 %v1267, %v1271
    %v1278 = vadd.s32 %v1270, %v1276
    %vm1279 = vc.u32 %v1277, %v1273
    %v1280 = vsel %vm1279, 1, 0
    %v1281 = vadd.s32 %v1277, %v1273
    %v1282 = vadd.s32 %v1278, %v1280
    %v1283 = vadd.s32 %v1282, %v1272
    %v1284 = vadd.s32 %v1283, %v1274
    %v1285 = vand.u32 %v1262, 65535
    %v1286 = vshrl.u32 %v1262, 16
    %v1287 = vand.u32 %v1257, 65535
    %v1288 = vshrl.u32 %v1257, 16
    %v1289 = vmul.u32 %v1285, %v1287
    %v1290 = vmul.u32 %v1285, %v1288
    %v1291 = vmul.u32 %v1286, %v1287
    %v1292 = vmul.u32 %v1286, %v1288
    %v1293 = vshll.u32 %v1290, 16
    %v1294 = vshrl.u32 %v1290, 16
    %v1295 = vshll.u32 %v1291, 16
    %v1296 = vshrl.u32 %v1291, 16
    %vm1297 = vc.u32 %v1289, %v1293
    %v1298 = vsel %vm1297, 1, 0
    %v1299 = vadd.s32 %v1289, %v1293
    %v1300 = vadd.s32 %v1292, %v1298
    %vm1301 = vc.u32 %v1299, %v1295
    %v1302 = vsel %vm1301, 1, 0
    %v1303 = vadd.s32 %v1299, %v1295
    %v1304 = vadd.s32 %v1300, %v1302
    %v1305 = vadd.s32 %v1304, %v1294
    %v1306 = vadd.s32 %v1305, %v1296
    %v1307 = vmul.u32 %v1262, %v1253
    %v1308 = vadd.s32 %v1284, %v1303
    %vm1309 = vc.u32 %v1284, %v1303
    %v1310 = vadd.s32 %v1306, 1
    %v1311 = vsel %vm1309, %v1310, %v1306
    %v1312 = vadd.s32 %v1307, %v1311
    %v1313 = vadd.s32 %v1312, 536870912
    %v1314 = vshrl.u32 %v1313, 30
    %v1315 = vshll.u32 %v1314, 30
    %v1316 = vsub.s32 %v1312, %v1315
    %vm1317 = vcmp.lt.s32.totalorder %v1316, 0
    %v1318 = vsub.s32 0, %v1316
    %v1319 = vsel %vm1317, %v1318, %v1316
    %v1320 = vclz %v1319
    %v1321 = vsub.s32 %v1320, 2
    %vm1322 = vcmp.gt.s32.totalorder 0, %v1321
    %v1323 = vsel %vm1322, 0, %v1321
    %v1324 = vsub.s32 32, %v1323
    %v1325 = vshll.u32 %v1316, %v1323
    %v1326 = vshrl.u32 %v1308, %v1324
    %v1327 = vor.u32 %v1325, %v1326
    %v1328 = vsub.s32 4294967266, %v1323
    %v1329 = vadd.s32 %v1328, 127
    %v1330 = vshll.u32 %v1329, 23
    %v1331 = vor.u32 4788187, %v1330
    %v1332 = vand.u32 2147483647, %v1331
    %v1334 = vcvt.s32.f32 %v1327
    %v1335 = vmul.f32 %v1334, %v1332
    %v1336 = vxor.u32 %v1335, 2147483648
    %v1337 = vsel %vm1216, %v1336, %v1335
    %v1338 = vsub.s32 4, %v1314
    %v1339 = vsel %vm1216, %v1338, %v1314
    %v1340 = vsel %vm1215, %v751, %v1337
    %v1341 = vsel %vm1215, 0, %v1339
    %v1342 = vmul.f32 %v1340, %v1340
    %v1343 = vmul.f32 %v1342, -0.001358992
    %v1344 = vadd.f32 %v1343, 0.041655596
    %v1345 = vmul.f32 %v1342, %v1344
    %v1346 = vadd.f32 %v1345, -0.4999988
    %v1347 = vmul.f32 %v1342, %v1346
    %v1348 = vadd.f32 1.0, %v1347
    %v1349 = vmul.f32 %v1340, %v1340
    %v1350 = vmul.f32 %v1349, -0.00019511016
    %v1351 = vadd.f32 %v1350, 0.008332121
    %v1352 = vmul.f32 %v1349, %v1351
    %v1353 = vadd.f32 %v1352, -0.16666654
    %v1354 = vmul.f32 %v1349, %v1353
    %v1355 = vadd.f32 %v1354, 1.0
    %v1356 = vmul.f32 %v1355, %v1340
    %vm1357 = vweird.f32 %v751
    %v1358 = vand.u32 %v1341, 3
    %vm1359 = vcmp.lt.s32.totalorder %v1358, 2
    %vm1360 = vcmp.eq.s32.totalorder %v1358, 0
    %v1361 = vxor.u32 %v1356, 2147483648
    %v1362 = vsel %vm1360, %v1348, %v1361
    %vm1363 = vcmp.eq.s32.totalorder %v1358, 2
    %v1364 = vxor.u32 %v1348, 2147483648
    %v1365 = vsel %vm1363, %v1364, %v1356
    %v1366 = vsel %vm1359, %v1362, %v1365
    %v1367 = vsel %vm1357, nan, %v1366
    %1368 = vst [vmem:[#allocation10] sm:$0xff] %v905
    %1369 = vst [vmem:[#allocation10 + $0x8] sm:$0xff] %v1059
    %1370 = vst [vmem:[#allocation10 + $0x10] sm:$0xff] %v1213
    %1371 = vst [vmem:[#allocation10 + $0x18] sm:$0xff] %v1367
    // Predicated region
    $region34: #{tpu_custom_call.1} parent=1 // pred_check
      _
    $region35: #{tpu_custom_call.1} parent=1 // pred_check_branch
      %1373 = sbr.rel (0) target = $region37
    $region36: #{tpu_custom_call.1} parent=1 // pred_region
      %1375 = vsyncadd [#allocation4], 0
      %s1377 = sshll.u32 [#allocation10], 4
      %s1378 = int_to_ptr.vmem [resolvable:$true] %s1377
      %s1379 = sshll.u32 %s4, 4
      %s1380 = int_to_ptr.hbm [resolvable:$true] %s1379
      %1382 = dma.vmem_to_hbm [thread:$0]  %s1378, 512, %s1380, [#allocation4]
    $region37: #{tpu_custom_call.1} parent=1 // pred_fallthru
      _
    // Predicated region
    $region38: #{tpu_custom_call.1} parent=1 // pred_check
      _
    $region39: #{tpu_custom_call.1} parent=1 // pred_check_branch
      %1384 = sbr.rel (0) target = $region41
    $region40: #{tpu_custom_call.1} parent=1 // pred_region
      %1386 = dma.done [#allocation4], 512
    $region41: #{tpu_custom_call.1} parent=1 // pred_fallthru
      _
    %1387 = vsyncpa [#allocation3], 1
    %1388 = vsyncpa [#allocation6], 1
    %1389 = vsyncpa [#allocation9], 1
    %1390 = vsyncpa [#allocation4], 1

</llo_original>
